<compile_context>
chip_gen: v7x
topology: tpu7x:2x2x1
jax: 0.10.0
libtpu: 0.0.40
codegen_flags: <defaults>
</compile_context>

<pallas_src>
import functools

import jax
import jax.numpy as jnp
from jax.experimental import pallas as pl
from jax.experimental.pallas import tpu as pltpu

LANE = 128
SUBLANE = 8


def _round_up(n, m):
    return ((n + m - 1) // m) * m


# ----------------------------------------------------------------------------
# Fused Pallas kernel: whole MLP in a single call
# ----------------------------------------------------------------------------
def _fused_mlp_kernel(*refs, num_layers, valid_last):
    """refs = (x, w0, b0, w1, b1, ..., w_{L-1}, b_{L-1}, s1_out, ..., sL_out).

    Hidden layers: tanh(x @ W + b); last layer: softmax(x @ W + b) over the
    first `valid_last` (un-padded) logit columns.
    """
    x_ref = refs[0]
    wb_refs = refs[1:1 + 2 * num_layers]
    out_refs = refs[1 + 2 * num_layers:]

    h = x_ref[...]

    # Hidden layers, all intermediates stay on-chip.
    for i in range(num_layers - 1):
        w = wb_refs[2 * i][...]
        b = wb_refs[2 * i + 1][...]          # (1, out_pad) -> broadcasts over batch
        y = jnp.dot(h, w, preferred_element_type=jnp.float32)
        h = jnp.tanh(y + b)
        out_refs[i][...] = h.astype(out_refs[i].dtype)

    # Final layer: exp(log_softmax(.)) == softmax, masking padded lanes.
    w = wb_refs[-2][...]
    b = wb_refs[-1][...]
    logits = jnp.dot(h, w, preferred_element_type=jnp.float32) + b
    col = jax.lax.broadcasted_iota(jnp.int32, logits.shape, 1)
    logits = jnp.where(col < valid_last, logits, jnp.float32(-1e30))
    m = jnp.max(logits, axis=1, keepdims=True)
    e = jnp.exp(logits - m)
    denom = jnp.sum(e, axis=1, keepdims=True)
    out_refs[-1][...] = (e * pl.reciprocal(denom, approx=True)).astype(
        out_refs[-1].dtype)


# ----------------------------------------------------------------------------
# Wrapper: pad to lane-dense shapes, one pallas_call, slice back
# ----------------------------------------------------------------------------
def _fused_mlp_forward(x, params, size_tab, tile_b_max):
    num_layers = len(size_tab) - 1
    batch = x.shape[0]

    in_pad = _round_up(size_tab[0], LANE)
    out_pads = [_round_up(size_tab[i + 1], LANE) for i in range(num_layers)]

    tile_b = min(_round_up(batch, SUBLANE), tile_b_max)
    batch_pad = _round_up(batch, tile_b)
    grid = (batch_pad // tile_b,)

    # Zero-pad x, weights and biases once (padding columns/rows contribute 0).
    x_p = jnp.zeros((batch_pad, in_pad), jnp.float32)
    x_p = x_p.at[:batch, :size_tab[0]].set(x.astype(jnp.float32))

    flat = []
    prev_pad = in_pad
    for i in range(num_layers):
        w, b = params[i]
        w_p = jnp.zeros((prev_pad, out_pads[i]), jnp.float32)
        w_p = w_p.at[:w.shape[0], :w.shape[1]].set(w)
        b_p = jnp.zeros((1, out_pads[i]), jnp.float32)
        b_p = b_p.at[:, :b.shape[1]].set(b)
        flat += [w_p, b_p]
        prev_pad = out_pads[i]

    kernel = functools.partial(_fused_mlp_kernel,
                               num_layers=num_layers,
                               valid_last=size_tab[-1])

    in_specs = [pl.BlockSpec((tile_b, in_pad), lambda i: (i, 0))]
    for li in range(num_layers):
        # Weights / biases: single full block, invariant across the batch grid.
        in_specs.append(pl.BlockSpec(flat[2 * li].shape, lambda i: (0, 0)))
        in_specs.append(pl.BlockSpec(flat[2 * li + 1].shape, lambda i: (0, 0)))

    out_specs = [pl.BlockSpec((tile_b, out_pads[li]), lambda i: (i, 0))
                 for li in range(num_layers)]
    out_shape = [jax.ShapeDtypeStruct((batch_pad, out_pads[li]), jnp.float32)
                 for li in range(num_layers)]

    outs = pl.pallas_call(
        kernel,
        grid=grid,
        in_specs=in_specs,
        out_specs=out_specs,
        out_shape=out_shape,
        compiler_params=pltpu.CompilerParams(
            dimension_semantics=("parallel",)),
    )(x_p, *flat)

    # Slice back to true (un-padded) activation shapes; s[0] is the input.
    s = [x]
    for li in range(num_layers):
        s.append(outs[li][:batch, :size_tab[li + 1]])
    return s


@functools.partial(jax.jit, static_argnames=("size_tab", "tile_b_max"))
def net_forward(x, flat_params, size_tab, tile_b_max=128):
    """Reproduces Net.forward: returns the full list of activations `s`."""
    num_layers = len(size_tab) - 1
    params = [(flat_params[2 * i], flat_params[2 * i + 1])
              for i in range(num_layers)]
    return _fused_mlp_forward(x, params, size_tab, tile_b_max)


# ----------------------------------------------------------------------------
# Parameter init (matches nn.Linear default U(-1/sqrt(in), 1/sqrt(in)))
# ----------------------------------------------------------------------------
def init_params(size_tab, key):
    params = []
    for i in range(len(size_tab) - 1):
        fan_in, fan_out = size_tab[i], size_tab[i + 1]
        key, kw, kb = jax.random.split(key, 3)
        bound = 1.0 / jnp.sqrt(fan_in)
        # Stored as [in, out] (transpose of PyTorch's [out, in]).
        w = jax.random.uniform(kw, (fan_in, fan_out), jnp.float32, -bound, bound)
        b = jax.random.uniform(kb, (1, fan_out), jnp.float32, -bound, bound)
        params.append((w, b))
    return params


# ----------------------------------------------------------------------------
# Main
# ----------------------------------------------------------------------------
if __name__ == "__main__":
    # Small, forward-consistent shapes: an MLP 32 -> 64 -> 64 -> 10.
    size_tab = (32, 64, 64, 10)
    batch = 8

    key = jax.random.PRNGKey(0)
    key, kx = jax.random.split(key)
    x = jax.random.normal(kx, (batch, size_tab[0]), dtype=jnp.float32)

    params = init_params(size_tab, key)
    flat_params = tuple(p for wb in params for p in wb)

    s = net_forward(x, flat_params, size_tab)
    s = [jax.block_until_ready(a) for a in s]

    # Reference check in plain JAX (same math, no Pallas).
    ref = [x]
    for i in range(len(size_tab) - 2):
        w, b = params[i]
        ref.append(jnp.tanh(ref[i] @ w + b))
    w, b = params[-1]
    ref.append(jax.nn.softmax(ref[-1] @ w + b, axis=1))

    # Hidden layers exact-ish; softmax uses the approx EUP reciprocal, so
    # allow a slightly looser tolerance there.
    tols = [0.0] + [1e-5] * (len(size_tab) - 2) + [1e-3]
    for a, r, tol in zip(s, ref, tols):
        assert a.shape == r.shape, (a.shape, r.shape)
        assert jnp.max(jnp.abs(a - r)) <= max(tol, 0.0) + 1e-12, (
            float(jnp.max(jnp.abs(a - r))), tol)

    print("KERNEL_OK")
</pallas_src>

<mosaic_0001>
module attributes {stable_mosaic.version = 11 : i64} {
  func.func @_fused_mlp_kernel(%arg0: i32, %arg1: memref<8x128xf32, #tpu.memory_space<vmem>>, %arg2: memref<128x128xf32, #tpu.memory_space<vmem>>, %arg3: memref<1x128xf32, #tpu.memory_space<vmem>>, %arg4: memref<128x128xf32, #tpu.memory_space<vmem>>, %arg5: memref<1x128xf32, #tpu.memory_space<vmem>>, %arg6: memref<128x128xf32, #tpu.memory_space<vmem>>, %arg7: memref<1x128xf32, #tpu.memory_space<vmem>>, %arg8: memref<8x128xf32, #tpu.memory_space<vmem>>, %arg9: memref<8x128xf32, #tpu.memory_space<vmem>>, %arg10: memref<8x128xf32, #tpu.memory_space<vmem>>) attributes {dimension_semantics = [#tpu.dimension_semantics<parallel>], iteration_bounds = array<i64: 1>, scalar_prefetch = 0 : i64, scratch_operands = 0 : i64, tpu.core_type = #tpu.core_type<tc>, window_params = [{transform_indices = @transform_0, window_bounds = array<i64: 8, 128>}, {pipeline_mode = #tpu.pipeline_mode<synchronous>, transform_indices = @transform_1, window_bounds = array<i64: 128, 128>}, {pipeline_mode = #tpu.pipeline_mode<synchronous>, transform_indices = @transform_2, window_bounds = array<i64: 1, 128>}, {pipeline_mode = #tpu.pipeline_mode<synchronous>, transform_indices = @transform_3, window_bounds = array<i64: 128, 128>}, {pipeline_mode = #tpu.pipeline_mode<synchronous>, transform_indices = @transform_4, window_bounds = array<i64: 1, 128>}, {pipeline_mode = #tpu.pipeline_mode<synchronous>, transform_indices = @transform_5, window_bounds = array<i64: 128, 128>}, {pipeline_mode = #tpu.pipeline_mode<synchronous>, transform_indices = @transform_6, window_bounds = array<i64: 1, 128>}, {transform_indices = @transform_7, window_bounds = array<i64: 8, 128>}, {transform_indices = @transform_8, window_bounds = array<i64: 8, 128>}, {transform_indices = @transform_9, window_bounds = array<i64: 8, 128>}]} {
    %c0 = arith.constant 0 : index
    %c0_0 = arith.constant 0 : index
    %0 = vector.load %arg1[%c0, %c0_0] : memref<8x128xf32, #tpu.memory_space<vmem>>, vector<8x128xf32>
    %c0_1 = arith.constant 0 : index
    %c0_2 = arith.constant 0 : index
    %1 = vector.load %arg2[%c0_1, %c0_2] : memref<128x128xf32, #tpu.memory_space<vmem>>, vector<128x128xf32>
    %c0_3 = arith.constant 0 : index
    %c0_4 = arith.constant 0 : index
    %2 = vector.load %arg3[%c0_3, %c0_4] : memref<1x128xf32, #tpu.memory_space<vmem>>, vector<1x128xf32>
    %cst = arith.constant dense<0.000000e+00> : vector<8x128xf32>
    %3 = tpu.matmul %0, %1, %cst {dimension_numbers = #tpu.dot_dimension_numbers<[1], [0], [0], [1], [0, 0, 1, 1], [], []>} : vector<8x128xf32>, vector<128x128xf32>, vector<8x128xf32> -> vector<8x128xf32>
    %4 = vector.broadcast %2 : vector<1x128xf32> to vector<8x128xf32>
    %5 = arith.addf %3, %4 : vector<8x128xf32>
    %6 = math.tanh %5 : vector<8x128xf32>
    %c0_5 = arith.constant 0 : index
    %c0_6 = arith.constant 0 : index
    %7 = vector.load %arg8[%c0_5, %c0_6] : memref<8x128xf32, #tpu.memory_space<vmem>>, vector<8x128xf32>
    tpu.vector_store %arg8[%c0_5, %c0_6], %6 {strides = array<i32>} : memref<8x128xf32, #tpu.memory_space<vmem>>, vector<8x128xf32>,
    %c0_7 = arith.constant 0 : index
    %c0_8 = arith.constant 0 : index
    %8 = vector.load %arg4[%c0_7, %c0_8] : memref<128x128xf32, #tpu.memory_space<vmem>>, vector<128x128xf32>
    %c0_9 = arith.constant 0 : index
    %c0_10 = arith.constant 0 : index
    %9 = vector.load %arg5[%c0_9, %c0_10] : memref<1x128xf32, #tpu.memory_space<vmem>>, vector<1x128xf32>
    %cst_11 = arith.constant dense<0.000000e+00> : vector<8x128xf32>
    %10 = tpu.matmul %6, %8, %cst_11 {dimension_numbers = #tpu.dot_dimension_numbers<[1], [0], [0], [1], [0, 0, 1, 1], [], []>} : vector<8x128xf32>, vector<128x128xf32>, vector<8x128xf32> -> vector<8x128xf32>
    %11 = vector.broadcast %9 : vector<1x128xf32> to vector<8x128xf32>
    %12 = arith.addf %10, %11 : vector<8x128xf32>
    %13 = math.tanh %12 : vector<8x128xf32>
    %c0_12 = arith.constant 0 : index
    %c0_13 = arith.constant 0 : index
    %14 = vector.load %arg9[%c0_12, %c0_13] : memref<8x128xf32, #tpu.memory_space<vmem>>, vector<8x128xf32>
    tpu.vector_store %arg9[%c0_12, %c0_13], %13 {strides = array<i32>} : memref<8x128xf32, #tpu.memory_space<vmem>>, vector<8x128xf32>,
    %c0_14 = arith.constant 0 : index
    %c0_15 = arith.constant 0 : index
    %15 = vector.load %arg6[%c0_14, %c0_15] : memref<128x128xf32, #tpu.memory_space<vmem>>, vector<128x128xf32>
    %c0_16 = arith.constant 0 : index
    %c0_17 = arith.constant 0 : index
    %16 = vector.load %arg7[%c0_16, %c0_17] : memref<1x128xf32, #tpu.memory_space<vmem>>, vector<1x128xf32>
    %cst_18 = arith.constant dense<0.000000e+00> : vector<8x128xf32>
    %17 = tpu.matmul %13, %15, %cst_18 {dimension_numbers = #tpu.dot_dimension_numbers<[1], [0], [0], [1], [0, 0, 1, 1], [], []>} : vector<8x128xf32>, vector<128x128xf32>, vector<8x128xf32> -> vector<8x128xf32>
    %18 = vector.broadcast %16 : vector<1x128xf32> to vector<8x128xf32>
    %19 = arith.addf %17, %18 : vector<8x128xf32>
    %20 = tpu.iota {dimensions = array<i32: 1>} : vector<8x128xi32>
    %c10_i32 = arith.constant 10 : i32
    %21 = vector.broadcast %c10_i32 : i32 to vector<8x128xi32>
    %22 = arith.cmpi slt, %20, %21 : vector<8x128xi32>
    %cst_19 = arith.constant -1.000000e+30 : f32
    %23 = vector.broadcast %cst_19 : f32 to vector<8x128xf32>
    %24 = arith.select %22, %19, %23 : vector<8x128xi1>, vector<8x128xf32>
    %cst_20 = arith.constant dense<0xFF800000> : vector<8xf32>
    %25 = vector.multi_reduction <maximumf>, %24, %cst_20 [1] : vector<8x128xf32> to vector<8xf32>
    %26 = vector.shape_cast %25 : vector<8xf32> to vector<8x1xf32>
    %27 = vector.broadcast %26 : vector<8x1xf32> to vector<8x128xf32>
    %28 = arith.subf %24, %27 : vector<8x128xf32>
    %29 = math.exp %28 : vector<8x128xf32>
    %cst_21 = arith.constant dense<0.000000e+00> : vector<8xf32>
    %30 = vector.multi_reduction <add>, %29, %cst_21 [1] : vector<8x128xf32> to vector<8xf32>
    %31 = vector.shape_cast %30 : vector<8xf32> to vector<8x1xf32>
    %32 = tpu.reciprocal %31 {approx = true} : vector<8x1xf32> -> vector<8x1xf32>
    %33 = vector.broadcast %32 : vector<8x1xf32> to vector<8x128xf32>
    %34 = arith.mulf %29, %33 : vector<8x128xf32>
    %c0_22 = arith.constant 0 : index
    %c0_23 = arith.constant 0 : index
    %35 = vector.load %arg10[%c0_22, %c0_23] : memref<8x128xf32, #tpu.memory_space<vmem>>, vector<8x128xf32>
    tpu.vector_store %arg10[%c0_22, %c0_23], %34 {strides = array<i32>} : memref<8x128xf32, #tpu.memory_space<vmem>>, vector<8x128xf32>,
    return
  }
  func.func @transform_0(%arg0: i32) -> (i32, i32) {
    %c0_i32 = arith.constant 0 : i32
    %c0_i32_0 = arith.constant 0 : i32
    return %arg0, %c0_i32 : i32, i32
  }
  func.func @transform_1(%arg0: i32) -> (i32, i32) {
    %c0_i32 = arith.constant 0 : i32
    %c0_i32_0 = arith.constant 0 : i32
    %c0_i32_1 = arith.constant 0 : i32
    return %c0_i32, %c0_i32_0 : i32, i32
  }
  func.func @transform_2(%arg0: i32) -> (i32, i32) {
    %c0_i32 = arith.constant 0 : i32
    %c0_i32_0 = arith.constant 0 : i32
    %c0_i32_1 = arith.constant 0 : i32
    return %c0_i32, %c0_i32_0 : i32, i32
  }
  func.func @transform_3(%arg0: i32) -> (i32, i32) {
    %c0_i32 = arith.constant 0 : i32
    %c0_i32_0 = arith.constant 0 : i32
    %c0_i32_1 = arith.constant 0 : i32
    return %c0_i32, %c0_i32_0 : i32, i32
  }
  func.func @transform_4(%arg0: i32) -> (i32, i32) {
    %c0_i32 = arith.constant 0 : i32
    %c0_i32_0 = arith.constant 0 : i32
    %c0_i32_1 = arith.constant 0 : i32
    return %c0_i32, %c0_i32_0 : i32, i32
  }
  func.func @transform_5(%arg0: i32) -> (i32, i32) {
    %c0_i32 = arith.constant 0 : i32
    %c0_i32_0 = arith.constant 0 : i32
    %c0_i32_1 = arith.constant 0 : i32
    return %c0_i32, %c0_i32_0 : i32, i32
  }
  func.func @transform_6(%arg0: i32) -> (i32, i32) {
    %c0_i32 = arith.constant 0 : i32
    %c0_i32_0 = arith.constant 0 : i32
    %c0_i32_1 = arith.constant 0 : i32
    return %c0_i32, %c0_i32_0 : i32, i32
  }
  func.func @transform_7(%arg0: i32) -> (i32, i32) {
    %c0_i32 = arith.constant 0 : i32
    %c0_i32_0 = arith.constant 0 : i32
    return %arg0, %c0_i32 : i32, i32
  }
  func.func @transform_8(%arg0: i32) -> (i32, i32) {
    %c0_i32 = arith.constant 0 : i32
    %c0_i32_0 = arith.constant 0 : i32
    return %arg0, %c0_i32 : i32, i32
  }
  func.func @transform_9(%arg0: i32) -> (i32, i32) {
    %c0_i32 = arith.constant 0 : i32
    %c0_i32_0 = arith.constant 0 : i32
    return %arg0, %c0_i32 : i32, i32
  }
}

</mosaic_0001>

<llo_original>
// kernel: net_forward.1
$region0: #{net_forward.1}
  #allocation0 [shape = 'u32[]', space=smem, size = 0x4, offset = 0x4, fixed_abs, tag = 'smem constant byte address 0x4 - core index']
  #allocation1 [shape = 'u32[144,128]{1,0:T(1,128)}', space=vmem, size = 0x12000, scoped, tag = 'internal scratch']
  %s0 = inlined_call_operand.vmem [shape: f32[8,128], index: 0, kind: input, shape index: {}]
  %s1 = inlined_call_operand.vmem [shape: f32[128,128], index: 1, kind: input, shape index: {}]
  %s2 = inlined_call_operand.vmem [shape: f32[1,128], index: 2, kind: input, shape index: {}]
  %s3 = inlined_call_operand.vmem [shape: f32[128,128], index: 3, kind: input, shape index: {}]
  %s4 = inlined_call_operand.vmem [shape: f32[1,128], index: 4, kind: input, shape index: {}]
  %s5 = inlined_call_operand.vmem [shape: f32[128,128], index: 5, kind: input, shape index: {}]
  %s6 = inlined_call_operand.vmem [shape: f32[1,128], index: 6, kind: input, shape index: {}]
  %s7 = inlined_call_operand.hbm [shape: f32[8,128], index: 7, kind: output, shape index: {0}]
  %s8 = inlined_call_operand.hbm [shape: f32[8,128], index: 8, kind: output, shape index: {1}]
  %s9 = inlined_call_operand.hbm [shape: f32[8,128], index: 9, kind: output, shape index: {2}]
  %10 = xla_tuple %s7, %s8, %s9
  %s11 = sld [smem:[#allocation0]]
  $region54: #{net_forward.1} parent=0
    _
  %s13 = ssub.s32 1, %s11
  %s14 = scalar_select 0, %s13, %s11
  $region1: #{net_forward.1} parent=0
    #allocation2 [shape = 'u8[4096]{0}', space=vmem, size = 0x1000, scoped, tag = 'output window, operand 0, single buffered']
    #allocation3 [shape = 's32[1]{0}', space=sflag, size = 0x4, scoped, tag = 'scoped memory for net_forward.1']
    #allocation4 [shape = 'u8[4096]{0}', space=vmem, size = 0x1000, scoped, tag = 'output window, operand 1, single buffered']
    #allocation5 [shape = 's32[1]{0}', space=sflag, size = 0x4, scoped, tag = 'scoped memory for net_forward.1']
    #allocation6 [shape = 'u8[4096]{0}', space=vmem, size = 0x1000, scoped, tag = 'output window, operand 2, single buffered']
    %15 = vsyncpa [#allocation3], 0
    %16 = vsyncpa [#allocation5], 0
    // Predicated region
    $region2: #{net_forward.1} parent=1 // pred_check
      _
    $region3: #{net_forward.1} parent=1 // pred_check_branch
      %18 = sbr.rel (0) target = $region5
    $region4: #{net_forward.1} parent=1 // pred_region
      _
    $region5: #{net_forward.1} parent=1 // pred_fallthru
      _
    // Predicated region
    $region6: #{net_forward.1} parent=1 // pred_check
      _
    $region7: #{net_forward.1} parent=1 // pred_check_branch
      %20 = sbr.rel (0) target = $region9
    $region8: #{net_forward.1} parent=1 // pred_region
      _
    $region9: #{net_forward.1} parent=1 // pred_fallthru
      _
    // Predicated region
    $region10: #{net_forward.1} parent=1 // pred_check
      _
    $region11: #{net_forward.1} parent=1 // pred_check_branch
      %22 = sbr.rel (0) target = $region13
    $region12: #{net_forward.1} parent=1 // pred_region
      _
    $region13: #{net_forward.1} parent=1 // pred_fallthru
      _
    // Predicated region
    $region14: #{net_forward.1} parent=1 // pred_check
      _
    $region15: #{net_forward.1} parent=1 // pred_check_branch
      %24 = sbr.rel (0) target = $region17
    $region16: #{net_forward.1} parent=1 // pred_region
      _
    $region17: #{net_forward.1} parent=1 // pred_fallthru
      _
    // Predicated region
    $region18: #{net_forward.1} parent=1 // pred_check
      _
    $region19: #{net_forward.1} parent=1 // pred_check_branch
      %26 = sbr.rel (0) target = $region21
    $region20: #{net_forward.1} parent=1 // pred_region
      _
    $region21: #{net_forward.1} parent=1 // pred_fallthru
      _
    // Predicated region
    $region22: #{net_forward.1} parent=1 // pred_check
      _
    $region23: #{net_forward.1} parent=1 // pred_check_branch
      %28 = sbr.rel (0) target = $region25
    $region24: #{net_forward.1} parent=1 // pred_region
      _
    $region25: #{net_forward.1} parent=1 // pred_fallthru
      _
    // Predicated region
    $region26: #{net_forward.1} parent=1 // pred_check
      _
    $region27: #{net_forward.1} parent=1 // pred_check_branch
      %30 = sbr.rel (0) target = $region29
    $region28: #{net_forward.1} parent=1 // pred_region
      _
    $region29: #{net_forward.1} parent=1 // pred_fallthru
      _
    %v31 = vld [vmem:[%s0] sm:$0xff]
    %v32 = vld [vmem:[%s1] sm:$0xff]
    %v33 = vld [vmem:[%s1 + $0x8] sm:$0xff]
    %v34 = vld [vmem:[%s1 + $0x10] sm:$0xff]
    %v35 = vld [vmem:[%s1 + $0x18] sm:$0xff]
    %v36 = vld [vmem:[%s1 + $0x20] sm:$0xff]
    %v37 = vld [vmem:[%s1 + $0x28] sm:$0xff]
    %v38 = vld [vmem:[%s1 + $0x30] sm:$0xff]
    %v39 = vld [vmem:[%s1 + $0x38] sm:$0xff]
    %v40 = vld [vmem:[%s1 + $0x40] sm:$0xff]
    %v41 = vld [vmem:[%s1 + $0x48] sm:$0xff]
    %v42 = vld [vmem:[%s1 + $0x50] sm:$0xff]
    %v43 = vld [vmem:[%s1 + $0x58] sm:$0xff]
    %v44 = vld [vmem:[%s1 + $0x60] sm:$0xff]
    %v45 = vld [vmem:[%s1 + $0x68] sm:$0xff]
    %v46 = vld [vmem:[%s1 + $0x70] sm:$0xff]
    %v47 = vld [vmem:[%s1 + $0x78] sm:$0xff]
    %v48 = vld [vmem:[%s2] sm:$0x1]
    %v50 = vlaneseq
    %v51 = vshrl.u32 %v50, 7
    %v52 = vsub.s32 0, %v51
    %v53 = vrot.slane %v48, %v52
    %55 = vmatprep.subr.mxu0 0.0
    %56 = vmatpush1.msra.mxu0 %v32
    %57 = vmatprep.subr.mxu0 0.0
    %58 = vmatpush1.msra.mxu0 %v33
    %59 = vmatprep.subr.mxu0 0.0
    %60 = vmatpush1.msra.mxu0 %v34
    %61 = vmatprep.subr.mxu0 0.0
    %62 = vmatpush1.msra.mxu0 %v35
    %63 = vmatprep.subr.mxu0 0.0
    %64 = vmatpush1.msra.mxu0 %v36
    %65 = vmatprep.subr.mxu0 0.0
    %66 = vmatpush1.msra.mxu0 %v37
    %67 = vmatprep.subr.mxu0 0.0
    %68 = vmatpush1.msra.mxu0 %v38
    %69 = vmatprep.subr.mxu0 0.0
    %70 = vmatpush1.msra.mxu0 %v39
    %71 = vmatprep.subr.mxu0 0.0
    %72 = vmatpush1.msra.mxu0 %v40
    %73 = vmatprep.subr.mxu0 0.0
    %74 = vmatpush1.msra.mxu0 %v41
    %75 = vmatprep.subr.mxu0 0.0
    %76 = vmatpush1.msra.mxu0 %v42
    %77 = vmatprep.subr.mxu0 0.0
    %78 = vmatpush1.msra.mxu0 %v43
    %79 = vmatprep.subr.mxu0 0.0
    %80 = vmatpush1.msra.mxu0 %v44
    %81 = vmatprep.subr.mxu0 0.0
    %82 = vmatpush1.msra.mxu0 %v45
    %83 = vmatprep.subr.mxu0 0.0
    %84 = vmatpush1.msra.mxu0 %v46
    %85 = vmatprep.subr.mxu0 0.0
    %86 = vmatpush1.msra.mxu0 %v47
    %87 = vmatprep.subr.mxu0 0.0
    %88 = vmatpush1.msra.mxu0 0.0
    %89 = vmatprep.subr.mxu0 0.0
    %90 = vmatpush1.msra.mxu0 0.0
    %91 = vmatprep.subr.mxu0 0.0
    %92 = vmatpush1.msra.mxu0 0.0
    %93 = vmatprep.subr.mxu0 0.0
    %94 = vmatpush1.msra.mxu0 0.0
    %95 = vmatprep.subr.mxu0 0.0
    %96 = vmatpush1.msra.mxu0 0.0
    %97 = vmatprep.subr.mxu0 0.0
    %98 = vmatpush1.msra.mxu0 0.0
    %99 = vmatprep.subr.mxu0 0.0
    %100 = vmatpush1.msra.mxu0 0.0
    %101 = vmatprep.subr.mxu0 0.0
    %102 = vmatpush1.msra.mxu0 0.0
    %103 = vmatprep.subr.mxu0 0.0
    %104 = vmatpush1.msra.mxu0 0.0
    %105 = vmatprep.subr.mxu0 0.0
    %106 = vmatpush1.msra.mxu0 0.0
    %107 = vmatprep.subr.mxu0 0.0
    %108 = vmatpush1.msra.mxu0 0.0
    %109 = vmatprep.subr.mxu0 0.0
    %110 = vmatpush1.msra.mxu0 0.0
    %111 = vmatprep.subr.mxu0 0.0
    %112 = vmatpush1.msra.mxu0 0.0
    %113 = vmatprep.subr.mxu0 0.0
    %114 = vmatpush1.msra.mxu0 0.0
    %115 = vmatprep.subr.mxu0 0.0
    %116 = vmatpush1.msra.mxu0 0.0
    %117 = vmatprep.subr.mxu0 0.0
    %118 = vmatpush1.msra.mxu0 0.0
    %119 = vmatprep.mubr.f32.mxu0 0.0
    %120 = vmatmul.mubr.f32.gmra.mrb[0].mxu0 %v31
    %v121 = vpop.f32.mrb[0].mxu0
    %v122 = vadd.f32 %v53, %v121
    %v123 = vpop.f32.mrb[0].mxu0
    %124 = vdwg.mxu0
    %v125 = vtanh.pop %v122
    %126 = vst [vmem:[#allocation2] sm:$0xff] %v125
    %v127 = vld [vmem:[%s3] sm:$0xff]
    %v128 = vld [vmem:[%s3 + $0x8] sm:$0xff]
    %v129 = vld [vmem:[%s3 + $0x10] sm:$0xff]
    %v130 = vld [vmem:[%s3 + $0x18] sm:$0xff]
    %v131 = vld [vmem:[%s3 + $0x20] sm:$0xff]
    %v132 = vld [vmem:[%s3 + $0x28] sm:$0xff]
    %v133 = vld [vmem:[%s3 + $0x30] sm:$0xff]
    %v134 = vld [vmem:[%s3 + $0x38] sm:$0xff]
    %v135 = vld [vmem:[%s3 + $0x40] sm:$0xff]
    %v136 = vld [vmem:[%s3 + $0x48] sm:$0xff]
    %v137 = vld [vmem:[%s3 + $0x50] sm:$0xff]
    %v138 = vld [vmem:[%s3 + $0x58] sm:$0xff]
    %v139 = vld [vmem:[%s3 + $0x60] sm:$0xff]
    %v140 = vld [vmem:[%s3 + $0x68] sm:$0xff]
    %v141 = vld [vmem:[%s3 + $0x70] sm:$0xff]
    %v142 = vld [vmem:[%s3 + $0x78] sm:$0xff]
    %v143 = vld [vmem:[%s4] sm:$0x1]
    %v145 = vlaneseq
    %v146 = vshrl.u32 %v145, 7
    %v147 = vsub.s32 0, %v146
    %v148 = vrot.slane %v143, %v147
    %150 = vmatprep.subr.mxu0 0.0
    %151 = vmatpush1.msra.mxu0 %v127
    %152 = vmatprep.subr.mxu0 0.0
    %153 = vmatpush1.msra.mxu0 %v128
    %154 = vmatprep.subr.mxu0 0.0
    %155 = vmatpush1.msra.mxu0 %v129
    %156 = vmatprep.subr.mxu0 0.0
    %157 = vmatpush1.msra.mxu0 %v130
    %158 = vmatprep.subr.mxu0 0.0
    %159 = vmatpush1.msra.mxu0 %v131
    %160 = vmatprep.subr.mxu0 0.0
    %161 = vmatpush1.msra.mxu0 %v132
    %162 = vmatprep.subr.mxu0 0.0
    %163 = vmatpush1.msra.mxu0 %v133
    %164 = vmatprep.subr.mxu0 0.0
    %165 = vmatpush1.msra.mxu0 %v134
    %166 = vmatprep.subr.mxu0 0.0
    %167 = vmatpush1.msra.mxu0 %v135
    %168 = vmatprep.subr.mxu0 0.0
    %169 = vmatpush1.msra.mxu0 %v136
    %170 = vmatprep.subr.mxu0 0.0
    %171 = vmatpush1.msra.mxu0 %v137
    %172 = vmatprep.subr.mxu0 0.0
    %173 = vmatpush1.msra.mxu0 %v138
    %174 = vmatprep.subr.mxu0 0.0
    %175 = vmatpush1.msra.mxu0 %v139
    %176 = vmatprep.subr.mxu0 0.0
    %177 = vmatpush1.msra.mxu0 %v140
    %178 = vmatprep.subr.mxu0 0.0
    %179 = vmatpush1.msra.mxu0 %v141
    %180 = vmatprep.subr.mxu0 0.0
    %181 = vmatpush1.msra.mxu0 %v142
    %182 = vmatprep.subr.mxu0 0.0
    %183 = vmatpush1.msra.mxu0 0.0
    %184 = vmatprep.subr.mxu0 0.0
    %185 = vmatpush1.msra.mxu0 0.0
    %186 = vmatprep.subr.mxu0 0.0
    %187 = vmatpush1.msra.mxu0 0.0
    %188 = vmatprep.subr.mxu0 0.0
    %189 = vmatpush1.msra.mxu0 0.0
    %190 = vmatprep.subr.mxu0 0.0
    %191 = vmatpush1.msra.mxu0 0.0
    %192 = vmatprep.subr.mxu0 0.0
    %193 = vmatpush1.msra.mxu0 0.0
    %194 = vmatprep.subr.mxu0 0.0
    %195 = vmatpush1.msra.mxu0 0.0
    %196 = vmatprep.subr.mxu0 0.0
    %197 = vmatpush1.msra.mxu0 0.0
    %198 = vmatprep.subr.mxu0 0.0
    %199 = vmatpush1.msra.mxu0 0.0
    %200 = vmatprep.subr.mxu0 0.0
    %201 = vmatpush1.msra.mxu0 0.0
    %202 = vmatprep.subr.mxu0 0.0
    %203 = vmatpush1.msra.mxu0 0.0
    %204 = vmatprep.subr.mxu0 0.0
    %205 = vmatpush1.msra.mxu0 0.0
    %206 = vmatprep.subr.mxu0 0.0
    %207 = vmatpush1.msra.mxu0 0.0
    %208 = vmatprep.subr.mxu0 0.0
    %209 = vmatpush1.msra.mxu0 0.0
    %210 = vmatprep.subr.mxu0 0.0
    %211 = vmatpush1.msra.mxu0 0.0
    %212 = vmatprep.subr.mxu0 0.0
    %213 = vmatpush1.msra.mxu0 0.0
    %214 = vmatprep.mubr.f32.mxu0 0.0
    %215 = vmatmul.mubr.f32.gmra.mrb[0].mxu0 %v125
    %v216 = vpop.f32.mrb[0].mxu0
    %v217 = vadd.f32 %v148, %v216
    %v218 = vpop.f32.mrb[0].mxu0
    %219 = vdwg.mxu0
    %v220 = vtanh.pop %v217
    %221 = vst [vmem:[#allocation4] sm:$0xff] %v220
    %v222 = vld [vmem:[%s5] sm:$0xff]
    %v223 = vld [vmem:[%s5 + $0x8] sm:$0xff]
    %v224 = vld [vmem:[%s5 + $0x10] sm:$0xff]
    %v225 = vld [vmem:[%s5 + $0x18] sm:$0xff]
    %v226 = vld [vmem:[%s5 + $0x20] sm:$0xff]
    %v227 = vld [vmem:[%s5 + $0x28] sm:$0xff]
    %v228 = vld [vmem:[%s5 + $0x30] sm:$0xff]
    %v229 = vld [vmem:[%s5 + $0x38] sm:$0xff]
    %v230 = vld [vmem:[%s5 + $0x40] sm:$0xff]
    %v231 = vld [vmem:[%s5 + $0x48] sm:$0xff]
    %v232 = vld [vmem:[%s5 + $0x50] sm:$0xff]
    %v233 = vld [vmem:[%s5 + $0x58] sm:$0xff]
    %v234 = vld [vmem:[%s5 + $0x60] sm:$0xff]
    %v235 = vld [vmem:[%s5 + $0x68] sm:$0xff]
    %v236 = vld [vmem:[%s5 + $0x70] sm:$0xff]
    %v237 = vld [vmem:[%s5 + $0x78] sm:$0xff]
    %v238 = vld [vmem:[%s6] sm:$0x1]
    %v240 = vlaneseq
    %v241 = vshrl.u32 %v240, 7
    %v242 = vsub.s32 0, %v241
    %v243 = vrot.slane %v238, %v242
    %245 = vmatprep.subr.mxu0 0.0
    %246 = vmatpush1.msra.mxu0 %v222
    %247 = vmatprep.subr.mxu0 0.0
    %248 = vmatpush1.msra.mxu0 %v223
    %249 = vmatprep.subr.mxu0 0.0
    %250 = vmatpush1.msra.mxu0 %v224
    %251 = vmatprep.subr.mxu0 0.0
    %252 = vmatpush1.msra.mxu0 %v225
    %253 = vmatprep.subr.mxu0 0.0
    %254 = vmatpush1.msra.mxu0 %v226
    %255 = vmatprep.subr.mxu0 0.0
    %256 = vmatpush1.msra.mxu0 %v227
    %257 = vmatprep.subr.mxu0 0.0
    %258 = vmatpush1.msra.mxu0 %v228
    %259 = vmatprep.subr.mxu0 0.0
    %260 = vmatpush1.msra.mxu0 %v229
    %261 = vmatprep.subr.mxu0 0.0
    %262 = vmatpush1.msra.mxu0 %v230
    %263 = vmatprep.subr.mxu0 0.0
    %264 = vmatpush1.msra.mxu0 %v231
    %265 = vmatprep.subr.mxu0 0.0
    %266 = vmatpush1.msra.mxu0 %v232
    %267 = vmatprep.subr.mxu0 0.0
    %268 = vmatpush1.msra.mxu0 %v233
    %269 = vmatprep.subr.mxu0 0.0
    %270 = vmatpush1.msra.mxu0 %v234
    %271 = vmatprep.subr.mxu0 0.0
    %272 = vmatpush1.msra.mxu0 %v235
    %273 = vmatprep.subr.mxu0 0.0
    %274 = vmatpush1.msra.mxu0 %v236
    %275 = vmatprep.subr.mxu0 0.0
    %276 = vmatpush1.msra.mxu0 %v237
    %277 = vmatprep.subr.mxu0 0.0
    %278 = vmatpush1.msra.mxu0 0.0
    %279 = vmatprep.subr.mxu0 0.0
    %280 = vmatpush1.msra.mxu0 0.0
    %281 = vmatprep.subr.mxu0 0.0
    %282 = vmatpush1.msra.mxu0 0.0
    %283 = vmatprep.subr.mxu0 0.0
    %284 = vmatpush1.msra.mxu0 0.0
    %285 = vmatprep.subr.mxu0 0.0
    %286 = vmatpush1.msra.mxu0 0.0
    %287 = vmatprep.subr.mxu0 0.0
    %288 = vmatpush1.msra.mxu0 0.0
    %289 = vmatprep.subr.mxu0 0.0
    %290 = vmatpush1.msra.mxu0 0.0
    %291 = vmatprep.subr.mxu0 0.0
    %292 = vmatpush1.msra.mxu0 0.0
    %293 = vmatprep.subr.mxu0 0.0
    %294 = vmatpush1.msra.mxu0 0.0
    %295 = vmatprep.subr.mxu0 0.0
    %296 = vmatpush1.msra.mxu0 0.0
    %297 = vmatprep.subr.mxu0 0.0
    %298 = vmatpush1.msra.mxu0 0.0
    %299 = vmatprep.subr.mxu0 0.0
    %300 = vmatpush1.msra.mxu0 0.0
    %301 = vmatprep.subr.mxu0 0.0
    %302 = vmatpush1.msra.mxu0 0.0
    %303 = vmatprep.subr.mxu0 0.0
    %304 = vmatpush1.msra.mxu0 0.0
    %305 = vmatprep.subr.mxu0 0.0
    %306 = vmatpush1.msra.mxu0 0.0
    %307 = vmatprep.subr.mxu0 0.0
    %308 = vmatpush1.msra.mxu0 0.0
    %309 = vmatprep.mubr.f32.mxu0 0.0
    %310 = vmatmul.mubr.f32.gmra.mrb[0].mxu0 %v220
    %v311 = vpop.f32.mrb[0].mxu0
    %v312 = vadd.f32 %v243, %v311
    %v313 = vpop.f32.mrb[0].mxu0
    %314 = vdwg.mxu0
    %v315 = vlaneseq
    %v316 = vand.u32 %v315, 127
    %vm317 = vcmp.lt.s32.totalorder %v316, 10
    %v318 = vsel %vm317, %v312, -1e+30
    %319 = vmax.xlane.f32.xlu0 %v318
    %v320 = vpop.xlane.xlu0 %319
    %v321 = vsub.f32 %v318, %v320
    %v322 = vmul.f32 %v321, 1.442695
    %v323 = vpow.pop %v322
    %324 = vadd.xlane.f32.xlu0 %v323
    %v325 = vpop.xlane.xlu0 %324
    %v326 = vrcp.pop %v325
    %v327 = vmul.f32 %v323, %v326
    %328 = vst [vmem:[#allocation6] sm:$0xff] %v327
    // Predicated region
    $region30: #{net_forward.1} parent=1 // pred_check
      _
    $region31: #{net_forward.1} parent=1 // pred_check_branch
      %330 = sbr.rel (0) target = $region33
    $region32: #{net_forward.1} parent=1 // pred_region
      %s332 = ssub.s32 128, 128
      %333 = vsyncadd [#allocation3], %s332
      %s335 = sshll.u32 [#allocation2], 4
      %s336 = int_to_ptr.vmem [resolvable:$true] %s335
      %338 = dma.vmem_to_hbm [thread:$0]  %s336, 128, %s7, [#allocation3]
    $region33: #{net_forward.1} parent=1 // pred_fallthru
      _
    // Predicated region
    $region34: #{net_forward.1} parent=1 // pred_check
      _
    $region35: #{net_forward.1} parent=1 // pred_check_branch
      %340 = sbr.rel (0) target = $region37
    $region36: #{net_forward.1} parent=1 // pred_region
      %s342 = ssub.s32 128, 128
      %343 = vsyncadd [#allocation5], %s342
      %s345 = sshll.u32 [#allocation4], 4
      %s346 = int_to_ptr.vmem [resolvable:$true] %s345
      %348 = dma.vmem_to_hbm [thread:$0]  %s346, 128, %s8, [#allocation5]
    $region37: #{net_forward.1} parent=1 // pred_fallthru
      _
    // Predicated region
    $region38: #{net_forward.1} parent=1 // pred_check
      _
    $region39: #{net_forward.1} parent=1 // pred_check_branch
      %350 = sbr.rel (0) target = $region41
    $region40: #{net_forward.1} parent=1 // pred_region
      %s352 = ssub.s32 128, 128
      %353 = vsyncadd [#allocation5], %s352
      %s355 = sshll.u32 [#allocation6], 4
      %s356 = int_to_ptr.vmem [resolvable:$true] %s355
      %358 = dma.vmem_to_hbm [thread:$0]  %s356, 128, %s9, [#allocation5]
    $region41: #{net_forward.1} parent=1 // pred_fallthru
      _
    // Predicated region
    $region42: #{net_forward.1} parent=1 // pred_check
      _
    $region43: #{net_forward.1} parent=1 // pred_check_branch
      %360 = sbr.rel (0) target = $region45
    $region44: #{net_forward.1} parent=1 // pred_region
      %361 = dma.done [#allocation3], 128
    $region45: #{net_forward.1} parent=1 // pred_fallthru
      _
    // Predicated region
    $region46: #{net_forward.1} parent=1 // pred_check
      _
    $region47: #{net_forward.1} parent=1 // pred_check_branch
      %363 = sbr.rel (0) target = $region49
    $region48: #{net_forward.1} parent=1 // pred_region
      %364 = dma.done [#allocation5], 128
    $region49: #{net_forward.1} parent=1 // pred_fallthru
      _
    // Predicated region
    $region50: #{net_forward.1} parent=1 // pred_check
      _
    $region51: #{net_forward.1} parent=1 // pred_check_branch
      %366 = sbr.rel (0) target = $region53
    $region52: #{net_forward.1} parent=1 // pred_region
      %367 = dma.done [#allocation5], 128
    $region53: #{net_forward.1} parent=1 // pred_fallthru
      _
    %368 = vsyncpa [#allocation3], 1
    %369 = vsyncpa [#allocation5], 1

</llo_original>
